<compile_context>
chip_gen: v6e
topology: v6e:2x2x1
jax: 0.10.0
libtpu: 0.0.40
codegen_flags: <defaults>
</compile_context>

<pallas_src>
import jax
import jax.numpy as jnp
from jax.experimental import pallas as pl
from jax.experimental.pallas import tpu as pltpu


def _yuv2rgb_kernel(m_ref, x_ref, o_ref):
    # m_ref: SMEM (3, 3) f32 conversion matrix M
    # x_ref: VMEM (TB, 3, TS, 128) block of YUV input
    # o_ref: VMEM (TB, 3, TS, 128) block of RGB output
    # Hoist the 9 SMEM scalar reads once (scalar loads / broadcasts aren't CSE'd).
    m00 = m_ref[0, 0]; m01 = m_ref[0, 1]; m02 = m_ref[0, 2]
    m10 = m_ref[1, 0]; m11 = m_ref[1, 1]; m12 = m_ref[1, 2]
    m20 = m_ref[2, 0]; m21 = m_ref[2, 1]; m22 = m_ref[2, 2]

    y = x_ref[:, 0, :, :]
    u = x_ref[:, 1, :, :]
    v = x_ref[:, 2, :, :]

    # rgb[c] = M[c,0]*Y + M[c,1]*U + M[c,2]*V   (== per-pixel x @ M.T)
    o_ref[:, 0, :, :] = m00 * y + (m01 * u + m02 * v)
    o_ref[:, 1, :, :] = m10 * y + (m11 * u + m12 * v)
    o_ref[:, 2, :, :] = m20 * y + (m21 * u + m22 * v)


def _pick_tiles(B, S, itemsize, target_block_bytes):
    """Pick (TB, TS) so one (TB, 3, TS, 128) block is <= target_block_bytes."""
    bytes_per_row = 3 * 128 * itemsize          # one S-row across the 3 channels
    img_bytes = S * bytes_per_row
    if img_bytes <= target_block_bytes:
        # Whole image fits in one block: coalesce full batch elements.
        TS = S
        TB = 1
        for tb in range(B, 0, -1):
            if B % tb == 0 and tb * img_bytes <= target_block_bytes:
                TB = tb
                break
    else:
        # Large image: tile along S; TS must be a multiple of 8 (sublanes).
        TB = 1
        TS = max(8, (target_block_bytes // bytes_per_row) // 8 * 8)
    return TB, TS


def yuv2rgb(x, M, *, target_block_bytes=4 << 20):
    """x: (B, 3, H, W) float32 YUV, M: (3, 3) float32. Returns (B, 3, H, W) RGB."""
    B, C, H, W = x.shape
    assert C == 3, "expected 3 (Y, U, V) channels"
    itemsize = jnp.dtype(x.dtype).itemsize

    # Lane-dense layout: flatten spatial dims into rows of 128 lanes.
    L = H * W
    S = pl.cdiv(L, 128)
    Lp = S * 128
    x_flat = x.reshape(B, 3, L)
    if Lp != L:
        x_flat = jnp.pad(x_flat, ((0, 0), (0, 0), (0, Lp - L)))
    x4 = x_flat.reshape(B, 3, S, 128)

    TB, TS = _pick_tiles(B, S, itemsize, target_block_bytes)
    grid = (B // TB, pl.cdiv(S, TS))
    block = (TB, 3, TS, 128)
    block_bytes = TB * 3 * TS * 128 * itemsize
    # Double-buffered input + output (+50% slack), capped at v7x physical VMEM.
    vmem_limit = int(min(64 << 20, max(16 << 20, 6 * block_bytes)))

    out4 = pl.pallas_call(
        _yuv2rgb_kernel,
        out_shape=jax.ShapeDtypeStruct((B, 3, S, 128), x.dtype),
        grid=grid,
        in_specs=[
            pl.BlockSpec(memory_space=pltpu.SMEM),                  # M (scalars)
            pl.BlockSpec(block, lambda b, s: (b, 0, s, 0)),         # YUV tiles
        ],
        out_specs=pl.BlockSpec(block, lambda b, s: (b, 0, s, 0)),   # RGB tiles
        compiler_params=pltpu.CompilerParams(
            dimension_semantics=("parallel", "parallel"),
            vmem_limit_bytes=vmem_limit),
        cost_estimate=pl.CostEstimate(
            flops=15 * B * L,                       # 9 mul + 6 add per pixel
            transcendentals=0,
            bytes_accessed=2 * B * 3 * L * itemsize),
    )(M, x4)

    out = out4.reshape(B, 3, Lp)
    if Lp != L:
        out = out[:, :, :L]
    return out.reshape(B, 3, H, W)


if __name__ == "__main__":
    # Deterministic parameter init (matches the module's __init__ constant).
    M = jnp.array([[1.0, 0.0, 1.13983],
                   [1.0, -0.39465, -0.5806],
                   [1.0, 2.03211, 0.0]], dtype=jnp.float32)

    key = jax.random.PRNGKey(0)
    x = jax.random.uniform(key, (2, 3, 16, 16), dtype=jnp.float32)  # NCHW, C=3 (YUV)

    out = yuv2rgb(x, M)
    out = jax.block_until_ready(out)

    # Reference: permute -> matmul with M.T -> permute back (pure JAX).
    ref = jnp.einsum("bchw,rc->brhw", x, M)
    assert out.shape == (2, 3, 16, 16)
    assert jnp.allclose(out, ref, atol=1e-5, rtol=1e-5)

    print("KERNEL_OK")
</pallas_src>

<mosaic_0001>
module attributes {stable_mosaic.version = 11 : i64} {
  func.func @_yuv2rgb_kernel(%arg0: i32, %arg1: i32, %arg2: memref<3x3xf32, #tpu.memory_space<smem>>, %arg3: memref<2x3x2x128xf32, #tpu.memory_space<vmem>>, %arg4: memref<2x3x2x128xf32, #tpu.memory_space<vmem>>) attributes {dimension_semantics = [#tpu.dimension_semantics<parallel>, #tpu.dimension_semantics<parallel>], iteration_bounds = array<i64: 1, 1>, scalar_prefetch = 0 : i64, scratch_operands = 0 : i64, tpu.core_type = #tpu.core_type<tc>, window_params = [{transform_indices = @transform_0, window_bounds = array<i64: 3, 3>}, {transform_indices = @transform_1, window_bounds = array<i64: 2, 3, 2, 128>}, {transform_indices = @transform_2, window_bounds = array<i64: 2, 3, 2, 128>}]} {
    %c0 = arith.constant 0 : index
    %c0_0 = arith.constant 0 : index
    %0 = memref.load %arg2[%c0, %c0_0] : memref<3x3xf32, #tpu.memory_space<smem>>
    %c0_1 = arith.constant 0 : index
    %c1 = arith.constant 1 : index
    %1 = memref.load %arg2[%c0_1, %c1] : memref<3x3xf32, #tpu.memory_space<smem>>
    %c0_2 = arith.constant 0 : index
    %c2 = arith.constant 2 : index
    %2 = memref.load %arg2[%c0_2, %c2] : memref<3x3xf32, #tpu.memory_space<smem>>
    %c1_3 = arith.constant 1 : index
    %c0_4 = arith.constant 0 : index
    %3 = memref.load %arg2[%c1_3, %c0_4] : memref<3x3xf32, #tpu.memory_space<smem>>
    %c1_5 = arith.constant 1 : index
    %c1_6 = arith.constant 1 : index
    %4 = memref.load %arg2[%c1_5, %c1_6] : memref<3x3xf32, #tpu.memory_space<smem>>
    %c1_7 = arith.constant 1 : index
    %c2_8 = arith.constant 2 : index
    %5 = memref.load %arg2[%c1_7, %c2_8] : memref<3x3xf32, #tpu.memory_space<smem>>
    %c2_9 = arith.constant 2 : index
    %c0_10 = arith.constant 0 : index
    %6 = memref.load %arg2[%c2_9, %c0_10] : memref<3x3xf32, #tpu.memory_space<smem>>
    %c2_11 = arith.constant 2 : index
    %c1_12 = arith.constant 1 : index
    %7 = memref.load %arg2[%c2_11, %c1_12] : memref<3x3xf32, #tpu.memory_space<smem>>
    %c2_13 = arith.constant 2 : index
    %c2_14 = arith.constant 2 : index
    %8 = memref.load %arg2[%c2_13, %c2_14] : memref<3x3xf32, #tpu.memory_space<smem>>
    %c0_15 = arith.constant 0 : index
    %c0_16 = arith.constant 0 : index
    %c0_17 = arith.constant 0 : index
    %c0_18 = arith.constant 0 : index
    %9 = vector.load %arg3[%c0_15, %c0_16, %c0_17, %c0_18] : memref<2x3x2x128xf32, #tpu.memory_space<vmem>>, vector<2x1x2x128xf32>
    %10 = vector.shape_cast %9 : vector<2x1x2x128xf32> to vector<2x2x128xf32>
    %c0_19 = arith.constant 0 : index
    %c1_20 = arith.constant 1 : index
    %c0_21 = arith.constant 0 : index
    %c0_22 = arith.constant 0 : index
    %11 = vector.load %arg3[%c0_19, %c1_20, %c0_21, %c0_22] : memref<2x3x2x128xf32, #tpu.memory_space<vmem>>, vector<2x1x2x128xf32>
    %12 = vector.shape_cast %11 : vector<2x1x2x128xf32> to vector<2x2x128xf32>
    %c0_23 = arith.constant 0 : index
    %c2_24 = arith.constant 2 : index
    %c0_25 = arith.constant 0 : index
    %c0_26 = arith.constant 0 : index
    %13 = vector.load %arg3[%c0_23, %c2_24, %c0_25, %c0_26] : memref<2x3x2x128xf32, #tpu.memory_space<vmem>>, vector<2x1x2x128xf32>
    %14 = vector.shape_cast %13 : vector<2x1x2x128xf32> to vector<2x2x128xf32>
    %15 = vector.broadcast %0 : f32 to vector<2x2x128xf32>
    %16 = arith.mulf %15, %10 : vector<2x2x128xf32>
    %17 = vector.broadcast %1 : f32 to vector<2x2x128xf32>
    %18 = arith.mulf %17, %12 : vector<2x2x128xf32>
    %19 = vector.broadcast %2 : f32 to vector<2x2x128xf32>
    %20 = arith.mulf %19, %14 : vector<2x2x128xf32>
    %21 = arith.addf %18, %20 : vector<2x2x128xf32>
    %22 = arith.addf %16, %21 : vector<2x2x128xf32>
    %c0_27 = arith.constant 0 : index
    %c0_28 = arith.constant 0 : index
    %c0_29 = arith.constant 0 : index
    %c0_30 = arith.constant 0 : index
    %23 = vector.load %arg4[%c0_27, %c0_28, %c0_29, %c0_30] : memref<2x3x2x128xf32, #tpu.memory_space<vmem>>, vector<2x1x2x128xf32>
    %24 = vector.shape_cast %23 : vector<2x1x2x128xf32> to vector<2x2x128xf32>
    %25 = vector.shape_cast %22 : vector<2x2x128xf32> to vector<2x1x2x128xf32>
    tpu.vector_store %arg4[%c0_27, %c0_28, %c0_29, %c0_30], %25 {strides = array<i32>} : memref<2x3x2x128xf32, #tpu.memory_space<vmem>>, vector<2x1x2x128xf32>,
    %26 = vector.broadcast %3 : f32 to vector<2x2x128xf32>
    %27 = arith.mulf %26, %10 : vector<2x2x128xf32>
    %28 = vector.broadcast %4 : f32 to vector<2x2x128xf32>
    %29 = arith.mulf %28, %12 : vector<2x2x128xf32>
    %30 = vector.broadcast %5 : f32 to vector<2x2x128xf32>
    %31 = arith.mulf %30, %14 : vector<2x2x128xf32>
    %32 = arith.addf %29, %31 : vector<2x2x128xf32>
    %33 = arith.addf %27, %32 : vector<2x2x128xf32>
    %c0_31 = arith.constant 0 : index
    %c1_32 = arith.constant 1 : index
    %c0_33 = arith.constant 0 : index
    %c0_34 = arith.constant 0 : index
    %34 = vector.load %arg4[%c0_31, %c1_32, %c0_33, %c0_34] : memref<2x3x2x128xf32, #tpu.memory_space<vmem>>, vector<2x1x2x128xf32>
    %35 = vector.shape_cast %34 : vector<2x1x2x128xf32> to vector<2x2x128xf32>
    %36 = vector.shape_cast %33 : vector<2x2x128xf32> to vector<2x1x2x128xf32>
    tpu.vector_store %arg4[%c0_31, %c1_32, %c0_33, %c0_34], %36 {strides = array<i32>} : memref<2x3x2x128xf32, #tpu.memory_space<vmem>>, vector<2x1x2x128xf32>,
    %37 = vector.broadcast %6 : f32 to vector<2x2x128xf32>
    %38 = arith.mulf %37, %10 : vector<2x2x128xf32>
    %39 = vector.broadcast %7 : f32 to vector<2x2x128xf32>
    %40 = arith.mulf %39, %12 : vector<2x2x128xf32>
    %41 = vector.broadcast %8 : f32 to vector<2x2x128xf32>
    %42 = arith.mulf %41, %14 : vector<2x2x128xf32>
    %43 = arith.addf %40, %42 : vector<2x2x128xf32>
    %44 = arith.addf %38, %43 : vector<2x2x128xf32>
    %c0_35 = arith.constant 0 : index
    %c2_36 = arith.constant 2 : index
    %c0_37 = arith.constant 0 : index
    %c0_38 = arith.constant 0 : index
    %45 = vector.load %arg4[%c0_35, %c2_36, %c0_37, %c0_38] : memref<2x3x2x128xf32, #tpu.memory_space<vmem>>, vector<2x1x2x128xf32>
    %46 = vector.shape_cast %45 : vector<2x1x2x128xf32> to vector<2x2x128xf32>
    %47 = vector.shape_cast %44 : vector<2x2x128xf32> to vector<2x1x2x128xf32>
    tpu.vector_store %arg4[%c0_35, %c2_36, %c0_37, %c0_38], %47 {strides = array<i32>} : memref<2x3x2x128xf32, #tpu.memory_space<vmem>>, vector<2x1x2x128xf32>,
    return
  }
  func.func @transform_0(%arg0: i32, %arg1: i32) -> (i32, i32) {
    %c0_i32 = arith.constant 0 : i32
    %c0_i32_0 = arith.constant 0 : i32
    %c0_i32_1 = arith.constant 0 : i32
    return %c0_i32, %c0_i32_0 : i32, i32
  }
  func.func @transform_1(%arg0: i32, %arg1: i32) -> (i32, i32, i32, i32) {
    %c0_i32 = arith.constant 0 : i32
    %c0_i32_0 = arith.constant 0 : i32
    %c0_i32_1 = arith.constant 0 : i32
    return %arg0, %c0_i32, %arg1, %c0_i32_0 : i32, i32, i32, i32
  }
  func.func @transform_2(%arg0: i32, %arg1: i32) -> (i32, i32, i32, i32) {
    %c0_i32 = arith.constant 0 : i32
    %c0_i32_0 = arith.constant 0 : i32
    %c0_i32_1 = arith.constant 0 : i32
    return %arg0, %c0_i32, %arg1, %c0_i32_0 : i32, i32, i32, i32
  }
}

</mosaic_0001>

<llo_original>
// kernel: tpu_custom_call.1
$region0: #{tpu_custom_call.1}
  #allocation0 [shape = 'u32[]', space=smem, size = 0x4, offset = 0x4, fixed_abs, tag = 'smem constant byte address 0x4 - core index']
  #allocation1 [shape = 'u32[144,128]{1,0:T(1,128)}', space=vmem, size = 0x12000, scoped, tag = 'internal scratch']
  %s0 = inlined_call_operand.hbm [shape: f32[3,3], index: 0, kind: input, shape index: {}]
  %s1 = inlined_call_operand.hbm [shape: f32[2,3,2,128], index: 1, kind: input, shape index: {}]
  %s2 = inlined_call_operand.hbm [shape: f32[2,3,2,128], index: 2, kind: output, shape index: {}]
  %s3 = sld [smem:[#allocation0]]
  $region26: #{tpu_custom_call.1} parent=0
    _
  %s5 = ssub.s32 1, %s3
  %s6 = scalar_select 0, %s5, %s3
  $region1: #{tpu_custom_call.1} parent=0
    #allocation2 [shape = 'u8[2048]{0}', space=smem, size = 0x800, scoped, tag = 'input window, operand 0, single buffered']
    #allocation3 [shape = 's32[1]{0}', space=sflag, size = 0x4, scoped, tag = 'scoped memory for tpu_custom_call.1']
    #allocation4 [shape = 's32[1]{0}', space=sflag, size = 0x4, scoped, tag = 'scoped memory for tpu_custom_call.1']
    #allocation5 [shape = 's32[1]{0}', space=sflag, size = 0x4, scoped, tag = 'scoped memory for tpu_custom_call.1']
    #allocation6 [shape = 'u8[6144]{0}', space=vmem, size = 0x1800, scoped, tag = 'input window, operand 1, single buffered']
    #allocation7 [shape = 'u8[6144]{0}', space=vmem, size = 0x1800, scoped, tag = 'output window, operand 0, single buffered']
    %7 = vsyncpa [#allocation5], 0
    %8 = vsyncpa [#allocation3], 0
    %9 = vsyncpa [#allocation4], 0
    // Predicated region
    $region2: #{tpu_custom_call.1} parent=1 // pred_check
      _
    $region3: #{tpu_custom_call.1} parent=1 // pred_check_branch
      %11 = sbr.rel (0) target = $region5
    $region4: #{tpu_custom_call.1} parent=1 // pred_region
      %s13 = ssub.s32 64, 64
      %14 = vsyncadd [#allocation5], %s13
      %17 = dma.hbm_to_smem %s0, 64, [#allocation2], [#allocation5]
    $region5: #{tpu_custom_call.1} parent=1 // pred_fallthru
      _
    // Predicated region
    $region6: #{tpu_custom_call.1} parent=1 // pred_check
      _
    $region7: #{tpu_custom_call.1} parent=1 // pred_check_branch
      %19 = sbr.rel (0) target = $region9
    $region8: #{tpu_custom_call.1} parent=1 // pred_region
      %s21 = ssub.s32 192, 192
      %22 = vsyncadd [#allocation3], %s21
      %s23 = sshll.u32 [#allocation6], 4
      %s24 = int_to_ptr.vmem [resolvable:$true] %s23
      %29 = dma.hbm_to_vmem [thread:$0]  %s1, 192, %s24, [#allocation3], 32, 32, 2
    $region9: #{tpu_custom_call.1} parent=1 // pred_fallthru
      _
    // Predicated region
    $region10: #{tpu_custom_call.1} parent=1 // pred_check
      _
    $region11: #{tpu_custom_call.1} parent=1 // pred_check_branch
      %31 = sbr.rel (0) target = $region13
    $region12: #{tpu_custom_call.1} parent=1 // pred_region
      %32 = dma.done [#allocation5], 64
    $region13: #{tpu_custom_call.1} parent=1 // pred_fallthru
      _
    // Predicated region
    $region14: #{tpu_custom_call.1} parent=1 // pred_check
      _
    $region15: #{tpu_custom_call.1} parent=1 // pred_check_branch
      %34 = sbr.rel (0) target = $region17
    $region16: #{tpu_custom_call.1} parent=1 // pred_region
      %35 = dma.done [#allocation3], 192
    $region17: #{tpu_custom_call.1} parent=1 // pred_fallthru
      _
    %36 = sfence
    %s37 = sld [smem:[#allocation2]]
    %s38 = sld [smem:[#allocation2 + $0x1]]
    %s39 = sld [smem:[#allocation2 + $0x2]]
    %s40 = sld [smem:[#allocation2 + $0x80]]
    %s41 = sld [smem:[#allocation2 + $0x81]]
    %s42 = sld [smem:[#allocation2 + $0x82]]
    %s43 = sld [smem:[#allocation2 + $0x100]]
    %s44 = sld [smem:[#allocation2 + $0x101]]
    %s45 = sld [smem:[#allocation2 + $0x102]]
    %v46 = vld [vmem:[#allocation6] sm:$0x3]
    %v47 = vld [vmem:[#allocation6 + $0x6] sm:$0x3]
    %s48 = scalar_lea.vmem [#allocation6], 2
    %v49 = vld [vmem:[%s48] sm:$0x3]
    %v50 = vld [vmem:[%s48 + $0x6] sm:$0x3]
    %s51 = scalar_lea.vmem [#allocation6], 4
    %v52 = vld [vmem:[%s51] sm:$0x3]
    %v53 = vld [vmem:[%s51 + $0x6] sm:$0x3]
    %v54 = vstv %s37
    %v55 = vmul.f32 %v54, %v46
    %v56 = vmul.f32 %v54, %v47
    %v57 = vstv %s38
    %v58 = vmul.f32 %v57, %v49
    %v59 = vmul.f32 %v57, %v50
    %v60 = vstv %s39
    %v61 = vmul.f32 %v60, %v52
    %v62 = vmul.f32 %v60, %v53
    %v63 = vadd.f32 %v58, %v61
    %v64 = vadd.f32 %v59, %v62
    %v65 = vadd.f32 %v55, %v63
    %v66 = vadd.f32 %v56, %v64
    %67 = vst [vmem:[#allocation7] sm:$0x3] %v65
    %68 = vst [vmem:[#allocation7 + $0x6] sm:$0x3] %v66
    %v69 = vstv %s40
    %v70 = vmul.f32 %v69, %v46
    %v71 = vmul.f32 %v69, %v47
    %v72 = vstv %s41
    %v73 = vmul.f32 %v72, %v49
    %v74 = vmul.f32 %v72, %v50
    %v75 = vstv %s42
    %v76 = vmul.f32 %v75, %v52
    %v77 = vmul.f32 %v75, %v53
    %v78 = vadd.f32 %v73, %v76
    %v79 = vadd.f32 %v74, %v77
    %v80 = vadd.f32 %v70, %v78
    %v81 = vadd.f32 %v71, %v79
    %s82 = scalar_lea.vmem [#allocation7], 2
    %83 = vst [vmem:[%s82] sm:$0x3] %v80
    %84 = vst [vmem:[%s82 + $0x6] sm:$0x3] %v81
    %v85 = vstv %s43
    %v86 = vmul.f32 %v85, %v46
    %v87 = vmul.f32 %v85, %v47
    %v88 = vstv %s44
    %v89 = vmul.f32 %v88, %v49
    %v90 = vmul.f32 %v88, %v50
    %v91 = vstv %s45
    %v92 = vmul.f32 %v91, %v52
    %v93 = vmul.f32 %v91, %v53
    %v94 = vadd.f32 %v89, %v92
    %v95 = vadd.f32 %v90, %v93
    %v96 = vadd.f32 %v86, %v94
    %v97 = vadd.f32 %v87, %v95
    %s98 = scalar_lea.vmem [#allocation7], 4
    %99 = vst [vmem:[%s98] sm:$0x3] %v96
    %100 = vst [vmem:[%s98 + $0x6] sm:$0x3] %v97
    // Predicated region
    $region18: #{tpu_custom_call.1} parent=1 // pred_check
      _
    $region19: #{tpu_custom_call.1} parent=1 // pred_check_branch
      %102 = sbr.rel (0) target = $region21
    $region20: #{tpu_custom_call.1} parent=1 // pred_region
      %s104 = ssub.s32 192, 192
      %105 = vsyncadd [#allocation4], %s104
      %s106 = sshll.u32 [#allocation7], 4
      %s107 = int_to_ptr.vmem [resolvable:$true] %s106
      %112 = dma.vmem_to_hbm [thread:$0]  %s107, 192, %s2, [#allocation4], 32, 32, 2
    $region21: #{tpu_custom_call.1} parent=1 // pred_fallthru
      _
    // Predicated region
    $region22: #{tpu_custom_call.1} parent=1 // pred_check
      _
    $region23: #{tpu_custom_call.1} parent=1 // pred_check_branch
      %114 = sbr.rel (0) target = $region25
    $region24: #{tpu_custom_call.1} parent=1 // pred_region
      %115 = dma.done [#allocation4], 192
    $region25: #{tpu_custom_call.1} parent=1 // pred_fallthru
      _
    %116 = vsyncpa [#allocation3], 1
    %117 = vsyncpa [#allocation4], 1
    %118 = vsyncpa [#allocation5], 1

</llo_original>
